<compile_context>
chip_gen: v6e
topology: v6e:2x2x1
jax: 0.10.0
libtpu: 0.0.40
codegen_flags: <defaults>
</compile_context>

<pallas_src>
import numpy as np
import jax
import jax.numpy as jnp
from jax import lax
from jax.experimental import pallas as pl
from jax.experimental.pallas import tpu as pltpu

LANE = 128
BF16_SUBLANE = 16


def _round_up(x, m):
    return (x + m - 1) // m * m


def word_attention_kernel(emb_ref, len_ref, ww_ref, bw_ref, wc_ref, bc_ref,
                          sent_ref, att_ref):
    emb = emb_ref[...]                              # (bs, Tp, H) bf16
    bs, Tp, H = emb.shape
    A = ww_ref.shape[1]

    # u_i = tanh(word_weight(words)) -- MXU matmul (bf16 in, f32 acc) + EUP tanh.
    # Tp is a multiple of the bf16 sublane tile (16), so this reshape is a free
    # re-view of the VMEM tile (no copy) regardless of H's internal lane padding.
    x2d = emb.reshape(bs * Tp, H)
    u = jnp.tanh(
        jnp.dot(x2d, ww_ref[...], preferred_element_type=jnp.float32)
        + bw_ref[...])                              # (bs*Tp, A) f32
    u = u.reshape(bs, Tp, A)

    # u_w = context_weight(u_i).squeeze(1): width-1 projection as a VPU multiply
    # + XLU lane-reduce over A (no N=1 MXU matmul).
    uw = jnp.sum(u * wc_ref[...], axis=-1) + bc_ref[...]       # (bs, Tp) f32

    # Masked softmax over the valid words of each sentence.
    # NOTE: PyTorch subtracts a *global* max before exp(); the per-sentence
    # normalization cancels that constant, so a per-sentence max is
    # mathematically identical (and numerically more stable).
    # Mask BEFORE the exp so padded lanes / fully-padded rows never see inf.
    lengths = len_ref[...]                          # (bs, 1) i32
    valid = lax.broadcasted_iota(jnp.int32, (bs, Tp), 1) < lengths
    uw_m = jnp.where(valid, uw, jnp.float32(-1e30))
    m = jnp.max(uw_m, axis=1, keepdims=True)
    att = jnp.exp(uw_m - m) * valid.astype(jnp.float32)
    denom = jnp.maximum(jnp.sum(att, axis=1, keepdims=True), jnp.float32(1e-30))
    att_w = att / denom                             # (bs, Tp) f32
    att_ref[...] = att_w

    # sentence embedding = att @ emb (per sentence): batched bf16 MXU
    # contraction over T with f32 accumulation.  Avoids materializing an f32
    # copy of the emb tile and a same-size product temp.
    attb = att_w.astype(jnp.bfloat16)[:, None, :]               # (bs, 1, Tp)
    sent = jnp.einsum('bqt,bth->bqh', attb, emb,
                      preferred_element_type=jnp.float32)       # (bs, 1, H) f32
    sent_ref[...] = sent[:, 0, :]


def _generation_config():
    """Per-TPU-generation tile-size / VMEM-cap tuning."""
    try:
        kind = jax.devices()[0].device_kind.lower()
    except Exception:
        kind = ""
    if ("v5" in kind) or ("v6" in kind):
        # v5e / v6e: 128 MiB physical VMEM, single TensorCore per chip -> big
        # tiles, no minimum grid-step count.
        return dict(vmem_cap=96 << 20, tile_bytes=16 << 20,
                    min_steps=1, prefer_even=False)
    # v7x (64 MiB VMEM per TC, 2 TCs share the grid) and unknown chips:
    # conservative cap, prefer an even grid with >= 4 steps when possible.
    return dict(vmem_cap=48 << 20, tile_bytes=8 << 20,
                min_steps=4, prefer_even=True)


def _vmem_bytes(bs, T_pad, H, A):
    """Lane-padded VMEM footprint estimate for one grid step (incl. double buffers)."""
    Hl = _round_up(H, LANE)
    Al = _round_up(A, LANE)
    Tl = _round_up(T_pad, LANE)
    emb_blk = bs * T_pad * Hl * 2                    # bf16 emb tile (lane-padded)
    len_blk = bs * LANE * 4
    wgt_blk = _round_up(H, 8) * Al * 2 + 3 * Al * 4
    out_blk = bs * Hl * 4 + bs * Tl * 4
    temps = (bs * T_pad * Al * 4                     # u (f32)
             + 8 * bs * Tl * 4                       # softmax temporaries
             + bs * T_pad * Hl * 2                   # bf16 attb / views slack
             + 2 * bs * Hl * 4)                      # weighted-sum result
    return 2 * (emb_blk + len_blk + wgt_blk) + 2 * out_blk + temps


def _choose_block_s(S, T_pad, H, A, cfg):
    row_bytes = T_pad * H * 2                        # real bf16 bytes per sentence
    S8 = _round_up(S, 8)
    bs = max(8, min(S8, (cfg['tile_bytes'] // max(row_bytes, 1)) // 8 * 8))

    def steps(b):
        return _round_up(S, b) // b

    # Keep at least min_steps grid steps when the problem is big enough.
    while bs > 8 and steps(bs) < cfg['min_steps']:
        bs = max(8, (bs // 2) // 8 * 8)
    # Prefer an even number of steps (v7x: two TensorCores share the grid).
    if cfg['prefer_even'] and bs > 8 and steps(bs) % 2 == 1:
        for cand in range(bs - 8, 7, -8):
            if steps(cand) % 2 == 0:
                bs = cand
                break
    # Shrink until the double-buffered VMEM footprint fits under the cap.
    while bs > 8 and _vmem_bytes(bs, T_pad, H, A) > int(0.75 * cfg['vmem_cap']):
        bs = max(8, (bs // 2) // 8 * 8)
    return bs


def word_attention_pallas(embeddings, sent_lengths, word_w, word_b, ctx_w, ctx_b,
                          *, block_s=None):
    """embeddings: (S, T, H) float; sent_lengths: (S,) int.
    word_w: (H, A) == word_weight.weight.T; word_b: A-element bias.
    ctx_w:  A-element context_weight.weight; ctx_b: scalar bias.
    Returns (sentence embeddings (S, H) f32, attention weights (S, T) f32)."""
    S, T, H = embeddings.shape
    A = int(np.asarray(word_w).shape[1])

    # Pad T only to the bf16 sublane tile (16) unless T is already near a lane;
    # H and A stay native (blocks span the full extent, so the (8,128) BlockSpec
    # rule is satisfied and DMA moves only real data).
    T_pad = _round_up(T, LANE) if T >= 96 else _round_up(T, BF16_SUBLANE)

    cfg = _generation_config()
    if block_s is None:
        bs = _choose_block_s(S, T_pad, H, A, cfg)
    else:
        assert block_s % 8 == 0
        bs = block_s
    S_pad = _round_up(S, bs)

    # bf16 BEFORE pad: halves the bytes written by the wrapper-side pad/cast.
    emb = jnp.asarray(embeddings).astype(jnp.bfloat16)
    emb = jnp.pad(emb, ((0, S_pad - S), (0, T_pad - T), (0, 0)))

    lens2d = jnp.pad(jnp.asarray(sent_lengths, jnp.int32).reshape(-1),
                     (0, S_pad - S)).reshape(S_pad, 1)

    ww = jnp.asarray(word_w, jnp.float32).astype(jnp.bfloat16)      # (H, A)
    bw = jnp.asarray(word_b, jnp.float32).reshape(1, A)
    wc = jnp.asarray(ctx_w, jnp.float32).reshape(1, A)
    bc = jnp.asarray(ctx_b, jnp.float32).reshape(1, 1)

    vmem_limit = int(min(cfg['vmem_cap'],
                         max(32 << 20, 2 * _vmem_bytes(bs, T_pad, H, A))))

    sents, att = pl.pallas_call(
        word_attention_kernel,
        out_shape=(jax.ShapeDtypeStruct((S_pad, H), jnp.float32),
                   jax.ShapeDtypeStruct((S_pad, T_pad), jnp.float32)),
        grid_spec=pltpu.PrefetchScalarGridSpec(
            num_scalar_prefetch=0,
            grid=(S_pad // bs,),
            in_specs=[
                pl.BlockSpec((bs, T_pad, H), lambda i: (i, 0, 0)),  # embeddings (bf16)
                pl.BlockSpec((bs, 1), lambda i: (i, 0)),            # sentence lengths
                pl.BlockSpec((H, A), lambda i: (0, 0)),             # word_weight.T (bf16)
                pl.BlockSpec((1, A), lambda i: (0, 0)),             # word bias
                pl.BlockSpec((1, A), lambda i: (0, 0)),             # context weight row
                pl.BlockSpec((1, 1), lambda i: (0, 0)),             # context bias
            ],
            out_specs=[
                pl.BlockSpec((bs, H), lambda i: (i, 0)),            # sentence embs
                pl.BlockSpec((bs, T_pad), lambda i: (i, 0)),        # att weights
            ],
        ),
        compiler_params=pltpu.CompilerParams(
            dimension_semantics=("parallel",),
            vmem_limit_bytes=vmem_limit),
    )(emb, lens2d, ww, bw, wc, bc)

    return sents[:S, :], att[:S, :T]


def word_attention_ref(embeddings, sent_lengths, word_w, word_b, ctx_w, ctx_b):
    """Pure-JAX reference mirroring the kernel's bf16 matmul inputs."""
    emb = jnp.asarray(embeddings, jnp.float32).astype(jnp.bfloat16).astype(jnp.float32)
    ww = jnp.asarray(word_w, jnp.float32).astype(jnp.bfloat16).astype(jnp.float32)
    u = jnp.tanh(jnp.einsum('sth,ha->sta', emb, ww)
                 + jnp.asarray(word_b, jnp.float32).reshape(1, 1, -1))
    uw = jnp.einsum('sta,a->st', u, jnp.asarray(ctx_w, jnp.float32).reshape(-1)) \
        + jnp.asarray(ctx_b, jnp.float32).reshape(())
    T = emb.shape[1]
    valid = (jnp.arange(T)[None, :]
             < jnp.asarray(sent_lengths, jnp.int32).reshape(-1, 1)).astype(jnp.float32)
    m = jnp.max(jnp.where(valid > 0, uw, -1e30), axis=1, keepdims=True)
    att = jnp.exp(jnp.where(valid > 0, uw - m, -1e30)) * valid
    att_w = att / jnp.maximum(att.sum(axis=1, keepdims=True), 1e-30)
    attw_bf = att_w.astype(jnp.bfloat16).astype(jnp.float32)   # kernel uses bf16 att in the MXU
    sents = jnp.einsum('st,sth->sh', attw_bf, emb)
    return sents, att_w


if __name__ == "__main__":
    # Small shapes consistent with the module:
    # num_docs=2, padded_doc_len=3, padded_sent_len(T)=8,
    # recurrent_size(H)=32, attention_dim(A)=16, vocab=50.
    num_docs, pad_doc_len, T = 2, 3, 8
    H, A, vocab = 32, 16, 50

    key = jax.random.PRNGKey(0)
    k_tok, k_params = jax.random.split(key)
    docs = jax.random.randint(k_tok, (num_docs, pad_doc_len, T), 0, vocab)
    doc_lengths = np.array([2, 3], dtype=np.int64)                 # unsorted on purpose
    sent_lengths = np.array([[5, 3, 0],
                             [8, 6, 4]], dtype=np.int64)
    attention_masks = (np.arange(T)[None, None, :]
                       < sent_lengths[:, :, None]).astype(np.int64)
    token_type_ids = np.zeros((num_docs, pad_doc_len, T), dtype=np.int64)

    # Deterministic parameter init (shapes from __init__):
    kw, kb, kc, kcb, ke = jax.random.split(k_params, 5)
    word_w = jax.random.normal(kw, (H, A), jnp.float32) * 0.1      # word_weight.weight.T
    word_b = jax.random.normal(kb, (1, A), jnp.float32) * 0.1      # word_weight.bias
    ctx_w = jax.random.normal(kc, (A, 1), jnp.float32) * 0.1       # context_weight.weight.T
    ctx_b = jax.random.normal(kcb, (1, 1), jnp.float32) * 0.1      # context_weight.bias
    emb_table = jax.random.normal(ke, (vocab, H), jnp.float32) * 0.5

    # ---- glue: doc-level sort + pack_padded_sequence equivalents ----
    doc_perm_idx = np.argsort(-doc_lengths, kind="stable")
    doc_lengths_sorted = doc_lengths[doc_perm_idx]
    docs_sorted = np.asarray(docs)[doc_perm_idx]
    sent_lengths_sorted = sent_lengths[doc_perm_idx]

    max_dl = int(doc_lengths_sorted.max())
    docs_valid_bsz = np.array(
        [int((doc_lengths_sorted > t).sum()) for t in range(max_dl)])
    pack_idx = [(b, t) for t in range(max_dl)
                for b in range(int(docs_valid_bsz[t]))]            # time-major order
    packed_sents = np.stack([docs_sorted[b, t] for (b, t) in pack_idx])   # (S_valid, T)
    packed_sent_lens = np.array([sent_lengths_sorted[b, t] for (b, t) in pack_idx])

    # sentence-level sort (descending sentence length)
    sent_perm_idx = np.argsort(-packed_sent_lens, kind="stable")
    sents_tokens = packed_sents[sent_perm_idx]
    sent_lens_sorted = packed_sent_lens[sent_perm_idx]

    # TODO(synk): BertModel.from_pretrained has no in-script equivalent; it is
    # replaced by a deterministic embedding-table lookup producing (S, T, H).
    embeddings = jnp.take(emb_table, jnp.asarray(sents_tokens), axis=0)
    S_valid = embeddings.shape[0]
    lens_i32 = jnp.asarray(sent_lens_sorted, jnp.int32)

    sents_out, att_out = word_attention_pallas(
        embeddings, lens_i32, word_w, word_b, ctx_w, ctx_b)
    sents_out = jax.block_until_ready(sents_out)
    att_out = jax.block_until_ready(att_out)

    # reference check (bf16-rounded matmul inputs, like the kernel)
    sents_ref, att_ref_w = word_attention_ref(
        embeddings, lens_i32, word_w, word_b, ctx_w, ctx_b)
    assert np.allclose(np.asarray(sents_out), np.asarray(sents_ref),
                       atol=5e-3, rtol=5e-3)
    assert np.allclose(np.asarray(att_out), np.asarray(att_ref_w),
                       atol=5e-3, rtol=5e-3)

    # un-permute back to packed-doc order, trim attention to the max valid length
    sent_unperm_idx = np.argsort(sent_perm_idx, kind="stable")
    max_sl = int(sent_lens_sorted.max())
    sents_final = np.asarray(sents_out)[sent_unperm_idx]                  # (S_valid, H)
    att_final = np.asarray(att_out)[:, :max_sl][sent_unperm_idx]          # (S_valid, max_sl)

    assert sents_final.shape == (S_valid, H)
    assert att_final.shape == (S_valid, max_sl)
    assert np.all(np.isfinite(sents_final)) and np.all(np.isfinite(att_final))
    # valid rows of att_final must each sum to 1
    assert np.allclose(att_final.sum(axis=1), 1.0, atol=1e-5)
    print("KERNEL_OK")
</pallas_src>

<mosaic_0001>
module attributes {stable_mosaic.version = 11 : i64} {
  func.func @word_attention_kernel(%arg0: i32, %arg1: memref<8x16x32xbf16, #tpu.memory_space<vmem>>, %arg2: memref<8x1xi32, #tpu.memory_space<vmem>>, %arg3: memref<32x16xbf16, #tpu.memory_space<vmem>>, %arg4: memref<1x16xf32, #tpu.memory_space<vmem>>, %arg5: memref<1x16xf32, #tpu.memory_space<vmem>>, %arg6: memref<1x1xf32, #tpu.memory_space<vmem>>, %arg7: memref<8x32xf32, #tpu.memory_space<vmem>>, %arg8: memref<8x16xf32, #tpu.memory_space<vmem>>) attributes {dimension_semantics = [#tpu.dimension_semantics<parallel>], iteration_bounds = array<i64: 1>, scalar_prefetch = 0 : i64, scratch_operands = 0 : i64, tpu.core_type = #tpu.core_type<tc>, window_params = [{transform_indices = @transform_0, window_bounds = array<i64: 8, 16, 32>}, {transform_indices = @transform_1, window_bounds = array<i64: 8, 1>}, {pipeline_mode = #tpu.pipeline_mode<synchronous>, transform_indices = @transform_2, window_bounds = array<i64: 32, 16>}, {pipeline_mode = #tpu.pipeline_mode<synchronous>, transform_indices = @transform_3, window_bounds = array<i64: 1, 16>}, {pipeline_mode = #tpu.pipeline_mode<synchronous>, transform_indices = @transform_4, window_bounds = array<i64: 1, 16>}, {pipeline_mode = #tpu.pipeline_mode<synchronous>, transform_indices = @transform_5, window_bounds = array<i64: 1, 1>}, {transform_indices = @transform_6, window_bounds = array<i64: 8, 32>}, {transform_indices = @transform_7, window_bounds = array<i64: 8, 16>}]} {
    %c0 = arith.constant 0 : index
    %c0_0 = arith.constant 0 : index
    %c0_1 = arith.constant 0 : index
    %0 = vector.load %arg1[%c0, %c0_0, %c0_1] : memref<8x16x32xbf16, #tpu.memory_space<vmem>>, vector<8x16x32xbf16>
    %1 = vector.shape_cast %0 : vector<8x16x32xbf16> to vector<128x32xbf16>
    %c0_2 = arith.constant 0 : index
    %c0_3 = arith.constant 0 : index
    %2 = vector.load %arg3[%c0_2, %c0_3] : memref<32x16xbf16, #tpu.memory_space<vmem>>, vector<32x16xbf16>
    %cst = arith.constant dense<0.000000e+00> : vector<128x16xf32>
    %3 = tpu.matmul %1, %2, %cst {dimension_numbers = #tpu.dot_dimension_numbers<[1], [0], [0], [1], [0, 0, 1, 1], [], []>} : vector<128x32xbf16>, vector<32x16xbf16>, vector<128x16xf32> -> vector<128x16xf32>
    %c0_4 = arith.constant 0 : index
    %c0_5 = arith.constant 0 : index
    %4 = vector.load %arg4[%c0_4, %c0_5] : memref<1x16xf32, #tpu.memory_space<vmem>>, vector<1x16xf32>
    %5 = vector.broadcast %4 : vector<1x16xf32> to vector<128x16xf32>
    %6 = arith.addf %3, %5 : vector<128x16xf32>
    %7 = math.tanh %6 : vector<128x16xf32>
    %8 = vector.shape_cast %7 : vector<128x16xf32> to vector<8x16x16xf32>
    %c0_6 = arith.constant 0 : index
    %c0_7 = arith.constant 0 : index
    %9 = vector.load %arg5[%c0_6, %c0_7] : memref<1x16xf32, #tpu.memory_space<vmem>>, vector<1x16xf32>
    %10 = vector.shape_cast %9 : vector<1x16xf32> to vector<1x1x16xf32>
    %11 = vector.broadcast %10 : vector<1x1x16xf32> to vector<8x16x16xf32>
    %12 = arith.mulf %8, %11 : vector<8x16x16xf32>
    %cst_8 = arith.constant dense<0.000000e+00> : vector<8x16xf32>
    %13 = vector.multi_reduction <add>, %12, %cst_8 [2] : vector<8x16x16xf32> to vector<8x16xf32>
    %c0_9 = arith.constant 0 : index
    %c0_10 = arith.constant 0 : index
    %14 = vector.load %arg6[%c0_9, %c0_10] : memref<1x1xf32, #tpu.memory_space<vmem>>, vector<1x1xf32>
    %15 = vector.broadcast %14 : vector<1x1xf32> to vector<8x16xf32>
    %16 = arith.addf %13, %15 : vector<8x16xf32>
    %c0_11 = arith.constant 0 : index
    %c0_12 = arith.constant 0 : index
    %17 = vector.load %arg2[%c0_11, %c0_12] : memref<8x1xi32, #tpu.memory_space<vmem>>, vector<8x1xi32>
    %18 = tpu.iota {dimensions = array<i32: 1>} : vector<8x16xi32>
    %19 = vector.broadcast %17 : vector<8x1xi32> to vector<8x16xi32>
    %20 = arith.cmpi slt, %18, %19 : vector<8x16xi32>
    %cst_13 = arith.constant -1.000000e+30 : f32
    %21 = vector.broadcast %cst_13 : f32 to vector<8x16xf32>
    %22 = arith.select %20, %16, %21 : vector<8x16xi1>, vector<8x16xf32>
    %cst_14 = arith.constant dense<0xFF800000> : vector<8xf32>
    %23 = vector.multi_reduction <maximumf>, %22, %cst_14 [1] : vector<8x16xf32> to vector<8xf32>
    %24 = vector.shape_cast %23 : vector<8xf32> to vector<8x1xf32>
    %25 = vector.broadcast %24 : vector<8x1xf32> to vector<8x16xf32>
    %26 = arith.subf %22, %25 : vector<8x16xf32>
    %27 = math.exp %26 : vector<8x16xf32>
    %28 = arith.extui %20 : vector<8x16xi1> to vector<8x16xi32>
    %29 = arith.sitofp %28 : vector<8x16xi32> to vector<8x16xf32>
    %30 = arith.mulf %27, %29 : vector<8x16xf32>
    %cst_15 = arith.constant dense<0.000000e+00> : vector<8xf32>
    %31 = vector.multi_reduction <add>, %30, %cst_15 [1] : vector<8x16xf32> to vector<8xf32>
    %32 = vector.shape_cast %31 : vector<8xf32> to vector<8x1xf32>
    %cst_16 = arith.constant 1.000000e-30 : f32
    %33 = vector.broadcast %cst_16 : f32 to vector<8x1xf32>
    %34 = arith.maximumf %32, %33 : vector<8x1xf32>
    %35 = vector.broadcast %34 : vector<8x1xf32> to vector<8x16xf32>
    %36 = arith.divf %30, %35 : vector<8x16xf32>
    %c0_17 = arith.constant 0 : index
    %c0_18 = arith.constant 0 : index
    %37 = vector.load %arg8[%c0_17, %c0_18] : memref<8x16xf32, #tpu.memory_space<vmem>>, vector<8x16xf32>
    tpu.vector_store %arg8[%c0_17, %c0_18], %36 {strides = array<i32>} : memref<8x16xf32, #tpu.memory_space<vmem>>, vector<8x16xf32>,
    %38 = arith.truncf %36 : vector<8x16xf32> to vector<8x16xbf16>
    %39 = vector.shape_cast %38 : vector<8x16xbf16> to vector<8x1x16xbf16>
    "tpu.trace_start"() <{level = 10 : i32, message = "bqt,bth->bqh"}> : () -> ()
    %cst_19 = arith.constant dense<0.000000e+00> : vector<8x1x32xf32>
    %40 = tpu.matmul %39, %0, %cst_19 {dimension_numbers = #tpu.dot_dimension_numbers<[2], [1], [1], [2], [0, 0, 0, 1, 1, 2], [0], [0]>} : vector<8x1x16xbf16>, vector<8x16x32xbf16>, vector<8x1x32xf32> -> vector<8x1x32xf32>
    "tpu.trace_stop"() : () -> ()
    %41 = vector.shape_cast %40 : vector<8x1x32xf32> to vector<8x32xf32>
    %c0_20 = arith.constant 0 : index
    %c0_21 = arith.constant 0 : index
    %42 = vector.load %arg7[%c0_20, %c0_21] : memref<8x32xf32, #tpu.memory_space<vmem>>, vector<8x32xf32>
    tpu.vector_store %arg7[%c0_20, %c0_21], %41 {strides = array<i32>} : memref<8x32xf32, #tpu.memory_space<vmem>>, vector<8x32xf32>,
    return
  }
  func.func @transform_0(%arg0: i32) -> (i32, i32, i32) {
    %c0_i32 = arith.constant 0 : i32
    %c0_i32_0 = arith.constant 0 : i32
    %c0_i32_1 = arith.constant 0 : i32
    return %arg0, %c0_i32, %c0_i32_0 : i32, i32, i32
  }
  func.func @transform_1(%arg0: i32) -> (i32, i32) {
    %c0_i32 = arith.constant 0 : i32
    %c0_i32_0 = arith.constant 0 : i32
    return %arg0, %c0_i32 : i32, i32
  }
  func.func @transform_2(%arg0: i32) -> (i32, i32) {
    %c0_i32 = arith.constant 0 : i32
    %c0_i32_0 = arith.constant 0 : i32
    %c0_i32_1 = arith.constant 0 : i32
    return %c0_i32, %c0_i32_0 : i32, i32
  }
  func.func @transform_3(%arg0: i32) -> (i32, i32) {
    %c0_i32 = arith.constant 0 : i32
    %c0_i32_0 = arith.constant 0 : i32
    %c0_i32_1 = arith.constant 0 : i32
    return %c0_i32, %c0_i32_0 : i32, i32
  }
  func.func @transform_4(%arg0: i32) -> (i32, i32) {
    %c0_i32 = arith.constant 0 : i32
    %c0_i32_0 = arith.constant 0 : i32
    %c0_i32_1 = arith.constant 0 : i32
    return %c0_i32, %c0_i32_0 : i32, i32
  }
  func.func @transform_5(%arg0: i32) -> (i32, i32) {
    %c0_i32 = arith.constant 0 : i32
    %c0_i32_0 = arith.constant 0 : i32
    %c0_i32_1 = arith.constant 0 : i32
    return %c0_i32, %c0_i32_0 : i32, i32
  }
  func.func @transform_6(%arg0: i32) -> (i32, i32) {
    %c0_i32 = arith.constant 0 : i32
    %c0_i32_0 = arith.constant 0 : i32
    return %arg0, %c0_i32 : i32, i32
  }
  func.func @transform_7(%arg0: i32) -> (i32, i32) {
    %c0_i32 = arith.constant 0 : i32
    %c0_i32_0 = arith.constant 0 : i32
    return %arg0, %c0_i32 : i32, i32
  }
}

</mosaic_0001>

<llo_original>
// kernel: tpu_custom_call.1
$region0: #{tpu_custom_call.1}
  #allocation0 [shape = 'u32[]', space=smem, size = 0x4, offset = 0x4, fixed_abs, tag = 'smem constant byte address 0x4 - core index']
  #allocation1 [shape = 'u32[144,128]{1,0:T(1,128)}', space=vmem, size = 0x12000, scoped, tag = 'internal scratch']
  #allocation2 [shape = 'f32[1,1]{1,0:T(1,128)S(1)}', space=vmem, size = 0x200, scoped, tag = 'scoped memory for tpu_custom_call.1']
  %s0 = inlined_call_operand.hbm [shape: bf16[8,16,32], index: 0, kind: input, shape index: {}]
  %s1 = inlined_call_operand.vmem [shape: s32[8,1], index: 1, kind: input, shape index: {}]
  %s2 = inlined_call_operand.vmem [shape: bf16[32,16], index: 2, kind: input, shape index: {}]
  %s3 = inlined_call_operand.vmem [shape: f32[1,16], index: 3, kind: input, shape index: {}]
  %s4 = inlined_call_operand.vmem [shape: f32[1,16], index: 4, kind: input, shape index: {}]
  %s5 = inlined_call_operand.<no memory space> [shape: f32[1,1], index: 5, kind: input, shape index: {}]
  %s6 = inlined_call_operand.hbm [shape: f32[8,32], index: 6, kind: output, shape index: {0}]
  %s7 = inlined_call_operand.hbm [shape: f32[8,16], index: 7, kind: output, shape index: {1}]
  %8 = xla_tuple %s6, %s7
  %s9 = sld [smem:[#allocation0]]
  $region46: #{tpu_custom_call.1} parent=0
    _
  %s11 = ssub.s32 1, %s9
  %s12 = scalar_select 0, %s11, %s9
  %v13 = vstv %s5
  %14 = vst [vmem:[#allocation2] sm:$0x1] %v13
  $region1: #{tpu_custom_call.1} parent=0
    #allocation3 [shape = 'u8[32768]{0}', space=vmem, size = 0x8000, scoped, tag = 'input window, operand 0, single buffered']
    #allocation4 [shape = 's32[1]{0}', space=sflag, size = 0x4, scoped, tag = 'scoped memory for tpu_custom_call.1']
    #allocation5 [shape = 's32[1]{0}', space=sflag, size = 0x4, scoped, tag = 'scoped memory for tpu_custom_call.1']
    #allocation6 [shape = 'u8[4096]{0}', space=vmem, size = 0x1000, scoped, tag = 'output window, operand 0, single buffered']
    #allocation7 [shape = 'u8[4096]{0}', space=vmem, size = 0x1000, scoped, tag = 'output window, operand 1, single buffered']
    #allocation8 [shape = 's32[1]{0}', space=sflag, size = 0x4, scoped, tag = 'scoped memory for tpu_custom_call.1']
    %15 = vsyncpa [#allocation4], 0
    %16 = vsyncpa [#allocation5], 0
    %17 = vsyncpa [#allocation8], 0
    // Predicated region
    $region2: #{tpu_custom_call.1} parent=1 // pred_check
      _
    $region3: #{tpu_custom_call.1} parent=1 // pred_check_branch
      %19 = sbr.rel (0) target = $region5
    $region4: #{tpu_custom_call.1} parent=1 // pred_region
      %s21 = ssub.s32 1024, 1024
      %22 = vsyncadd [#allocation4], %s21
      %s23 = sshll.u32 [#allocation3], 4
      %s24 = int_to_ptr.vmem [resolvable:$true] %s23
      %29 = dma.hbm_to_vmem [thread:$0]  %s0, 1024, %s24, [#allocation4], 64, 64, 4
    $region5: #{tpu_custom_call.1} parent=1 // pred_fallthru
      _
    // Predicated region
    $region6: #{tpu_custom_call.1} parent=1 // pred_check
      _
    $region7: #{tpu_custom_call.1} parent=1 // pred_check_branch
      %31 = sbr.rel (0) target = $region9
    $region8: #{tpu_custom_call.1} parent=1 // pred_region
      _
    $region9: #{tpu_custom_call.1} parent=1 // pred_fallthru
      _
    // Predicated region
    $region10: #{tpu_custom_call.1} parent=1 // pred_check
      _
    $region11: #{tpu_custom_call.1} parent=1 // pred_check_branch
      %33 = sbr.rel (0) target = $region13
    $region12: #{tpu_custom_call.1} parent=1 // pred_region
      _
    $region13: #{tpu_custom_call.1} parent=1 // pred_fallthru
      _
    // Predicated region
    $region14: #{tpu_custom_call.1} parent=1 // pred_check
      _
    $region15: #{tpu_custom_call.1} parent=1 // pred_check_branch
      %35 = sbr.rel (0) target = $region17
    $region16: #{tpu_custom_call.1} parent=1 // pred_region
      _
    $region17: #{tpu_custom_call.1} parent=1 // pred_fallthru
      _
    // Predicated region
    $region18: #{tpu_custom_call.1} parent=1 // pred_check
      _
    $region19: #{tpu_custom_call.1} parent=1 // pred_check_branch
      %37 = sbr.rel (0) target = $region21
    $region20: #{tpu_custom_call.1} parent=1 // pred_region
      _
    $region21: #{tpu_custom_call.1} parent=1 // pred_fallthru
      _
    // Predicated region
    $region22: #{tpu_custom_call.1} parent=1 // pred_check
      _
    $region23: #{tpu_custom_call.1} parent=1 // pred_check_branch
      %39 = sbr.rel (0) target = $region25
    $region24: #{tpu_custom_call.1} parent=1 // pred_region
      _
    $region25: #{tpu_custom_call.1} parent=1 // pred_fallthru
      _
    // Predicated region
    $region26: #{tpu_custom_call.1} parent=1 // pred_check
      _
    $region27: #{tpu_custom_call.1} parent=1 // pred_check_branch
      %41 = sbr.rel (0) target = $region29
    $region28: #{tpu_custom_call.1} parent=1 // pred_region
      %42 = dma.done [#allocation4], 1024
    $region29: #{tpu_custom_call.1} parent=1 // pred_fallthru
      _
    %v44 = vld [vmem:[#allocation3] sm:$0xf]
    %v45 = vld [vmem:[#allocation3 + $0x4] sm:$0xf]
    %v46 = vld [vmem:[#allocation3 + $0x8] sm:$0xf]
    %v47 = vld [vmem:[#allocation3 + $0xc] sm:$0xf]
    %v48 = vld [vmem:[#allocation3 + $0x10] sm:$0xf]
    %v49 = vld [vmem:[#allocation3 + $0x14] sm:$0xf]
    %v50 = vld [vmem:[#allocation3 + $0x18] sm:$0xf]
    %v51 = vld [vmem:[#allocation3 + $0x1c] sm:$0xf]
    %v52 = vld [vmem:[#allocation3 + $0x20] sm:$0xf]
    %v53 = vld [vmem:[#allocation3 + $0x24] sm:$0xf]
    %v54 = vld [vmem:[#allocation3 + $0x28] sm:$0xf]
    %v55 = vld [vmem:[#allocation3 + $0x2c] sm:$0xf]
    %v56 = vld [vmem:[#allocation3 + $0x30] sm:$0xf]
    %v57 = vld [vmem:[#allocation3 + $0x34] sm:$0xf]
    %v58 = vld [vmem:[#allocation3 + $0x38] sm:$0xf]
    %v59 = vld [vmem:[#allocation3 + $0x3c] sm:$0xf]
    %v60 = vld [vmem:[%s2] sm:$0xf]
    %v61 = vld [vmem:[%s2 + $0x4] sm:$0xf]
    %v62 = vld [vmem:[%s2 + $0x8] sm:$0xf]
    %v63 = vld [vmem:[%s2 + $0xc] sm:$0xf]
    %v64 = vld [vmem:[%s3] sm:$0x1]
    %v66 = vlaneseq
    %v67 = vshrl.u32 %v66, 7
    %v68 = vsub.s32 0, %v67
    %v69 = vrot.slane %v64, %v68
    %v87 = vunpack.c.l.b16 %v44
    %v88 = vunpack.c.l.b16 %v45
    %v89 = vunpack.c.l.b16 %v46
    %v90 = vunpack.c.l.b16 %v47
    %v91 = vunpack.c.l.b16 %v48
    %v92 = vunpack.c.l.b16 %v49
    %v93 = vunpack.c.l.b16 %v50
    %v94 = vunpack.c.l.b16 %v51
    %v95 = vunpack.c.l.b16 %v52
    %v96 = vunpack.c.l.b16 %v53
    %v97 = vunpack.c.l.b16 %v54
    %v98 = vunpack.c.l.b16 %v55
    %v99 = vunpack.c.l.b16 %v56
    %v100 = vunpack.c.l.b16 %v57
    %v101 = vunpack.c.l.b16 %v58
    %v102 = vunpack.c.l.b16 %v59
    %v103 = vpack.c.b16 %v88, %v87
    %v104 = vpack.c.b16 %v90, %v89
    %v105 = vpack.c.b16 %v92, %v91
    %v106 = vpack.c.b16 %v94, %v93
    %v107 = vpack.c.b16 %v96, %v95
    %v108 = vpack.c.b16 %v98, %v97
    %v109 = vpack.c.b16 %v100, %v99
    %v110 = vpack.c.b16 %v102, %v101
    %v115 = vunpack.c.l.b16 %v60
    %v116 = vunpack.c.l.b16 %v61
    %v117 = vunpack.c.l.b16 %v62
    %v118 = vunpack.c.l.b16 %v63
    %v119 = vpack.c.b16 %v116, %v115
    %v120 = vpack.c.b16 %v118, %v117
    %vm123 = vcmask 261120
    %v125 = vsel %vm123, %v103, 0
    %v128 = vsel %vm123, %v104, 0
    %v131 = vsel %vm123, %v105, 0
    %v134 = vsel %vm123, %v106, 0
    %v137 = vsel %vm123, %v107, 0
    %v140 = vsel %vm123, %v108, 0
    %v143 = vsel %vm123, %v109, 0
    %v146 = vsel %vm123, %v110, 0
    %148 = vmatprep.subr.bf16.mxu0 0
    %149 = vmatpush1.bf16.msra.mxu0 0
    %150 = vmatprep.subr.bf16.mxu0 0
    %151 = vmatpush1.bf16.msra.mxu0 0
    %152 = vmatprep.subr.bf16.mxu0 0
    %153 = vmatpush1.bf16.msra.mxu0 0
    %154 = vmatprep.subr.bf16.mxu0 0
    %155 = vmatpush1.bf16.msra.mxu0 0
    %156 = vmatprep.subr.bf16.mxu0 0
    %157 = vmatpush1.bf16.msra.mxu0 0
    %158 = vmatprep.subr.bf16.mxu0 0
    %159 = vmatpush1.bf16.msra.mxu0 0
    %160 = vmatprep.subr.bf16.mxu0 0
    %161 = vmatpush1.bf16.msra.mxu0 %v120
    %162 = vmatprep.subr.bf16.mxu0 0
    %163 = vmatpush1.bf16.msra.mxu0 %v119
    %164 = vmatprep.subr.bf16.mxu0 0
    %165 = vmatpush2.bf16.msra.mxu0 0
    %166 = vmatprep.subr.bf16.mxu0 0
    %167 = vmatpush2.bf16.msra.mxu0 0
    %168 = vmatprep.subr.bf16.mxu0 0
    %169 = vmatpush2.bf16.msra.mxu0 0
    %170 = vmatprep.subr.bf16.mxu0 0
    %171 = vmatpush2.bf16.msra.mxu0 0
    %172 = vmatprep.subr.bf16.mxu0 0
    %173 = vmatpush2.bf16.msra.mxu0 0
    %174 = vmatprep.subr.bf16.mxu0 0
    %175 = vmatpush2.bf16.msra.mxu0 0
    %176 = vmatprep.subr.bf16.mxu0 0
    %177 = vmatpush2.bf16.msra.mxu0 0
    %178 = vmatprep.subr.bf16.mxu0 0
    %179 = vmatpush2.bf16.msra.mxu0 0
    %180 = vmatprep.mubr.bf16.mxu0 0
    %181 = vmatmul.mubr.bf16.gmra.mxu0 %v125
    %v182 = vpop.f32.mrf.mxu0
    %v183 = vadd.f32 %v69, %v182
    %v184 = vpop.f32.mrf.mxu0
    %v185 = vpop.f32.mrf.mxu0
    %v186 = vadd.f32 %v69, %v185
    %v187 = vpop.f32.mrf.mxu0
    %188 = vmatprep.mubr.bf16.mxu0 0
    %189 = vmatmul.mubr.bf16.gmra.mxu0 %v128
    %v190 = vpop.f32.mrf.mxu0
    %v191 = vadd.f32 %v69, %v190
    %v192 = vpop.f32.mrf.mxu0
    %v193 = vpop.f32.mrf.mxu0
    %v194 = vadd.f32 %v69, %v193
    %v195 = vpop.f32.mrf.mxu0
    %196 = vmatprep.mubr.bf16.mxu0 0
    %197 = vmatmul.mubr.bf16.gmra.mxu0 %v131
    %v198 = vpop.f32.mrf.mxu0
    %v199 = vadd.f32 %v69, %v198
    %v200 = vpop.f32.mrf.mxu0
    %v201 = vpop.f32.mrf.mxu0
    %v202 = vadd.f32 %v69, %v201
    %v203 = vpop.f32.mrf.mxu0
    %204 = vmatprep.mubr.bf16.mxu0 0
    %205 = vmatmul.mubr.bf16.gmra.mxu0 %v134
    %v206 = vpop.f32.mrf.mxu0
    %v207 = vadd.f32 %v69, %v206
    %v208 = vpop.f32.mrf.mxu0
    %v209 = vpop.f32.mrf.mxu0
    %v210 = vadd.f32 %v69, %v209
    %v211 = vpop.f32.mrf.mxu0
    %212 = vmatprep.mubr.bf16.mxu0 0
    %213 = vmatmul.mubr.bf16.gmra.mxu0 %v137
    %v214 = vpop.f32.mrf.mxu0
    %v215 = vadd.f32 %v69, %v214
    %v216 = vpop.f32.mrf.mxu0
    %v217 = vpop.f32.mrf.mxu0
    %v218 = vadd.f32 %v69, %v217
    %v219 = vpop.f32.mrf.mxu0
    %220 = vmatprep.mubr.bf16.mxu0 0
    %221 = vmatmul.mubr.bf16.gmra.mxu0 %v140
    %v222 = vpop.f32.mrf.mxu0
    %v223 = vadd.f32 %v69, %v222
    %v224 = vpop.f32.mrf.mxu0
    %v225 = vpop.f32.mrf.mxu0
    %v226 = vadd.f32 %v69, %v225
    %v227 = vpop.f32.mrf.mxu0
    %228 = vmatprep.mubr.bf16.mxu0 0
    %229 = vmatmul.mubr.bf16.gmra.mxu0 %v143
    %v230 = vpop.f32.mrf.mxu0
    %v231 = vadd.f32 %v69, %v230
    %v232 = vpop.f32.mrf.mxu0
    %v233 = vpop.f32.mrf.mxu0
    %v234 = vadd.f32 %v69, %v233
    %v235 = vpop.f32.mrf.mxu0
    %236 = vmatprep.mubr.bf16.mxu0 0
    %237 = vmatmul.mubr.bf16.gmra.mxu0 %v146
    %v238 = vpop.f32.mrf.mxu0
    %v239 = vadd.f32 %v69, %v238
    %v240 = vpop.f32.mrf.mxu0
    %v241 = vpop.f32.mrf.mxu0
    %v242 = vadd.f32 %v69, %v241
    %v243 = vpop.f32.mrf.mxu0
    %244 = vdwg.mxu0
    %v245 = vtanh.pop %v183
    %v246 = vtanh.pop %v186
    %v247 = vtanh.pop %v191
    %v248 = vtanh.pop %v194
    %v249 = vtanh.pop %v199
    %v250 = vtanh.pop %v202
    %v251 = vtanh.pop %v207
    %v252 = vtanh.pop %v210
    %v253 = vtanh.pop %v215
    %v254 = vtanh.pop %v218
    %v255 = vtanh.pop %v223
    %v256 = vtanh.pop %v226
    %v257 = vtanh.pop %v231
    %v258 = vtanh.pop %v234
    %v259 = vtanh.pop %v239
    %v260 = vtanh.pop %v242
    %v261 = vld [vmem:[%s4] sm:$0x1]
    %v263 = vlaneseq
    %v264 = vshrl.u32 %v263, 7
    %v265 = vsub.s32 0, %v264
    %v266 = vrot.slane %v261, %v265
    %v268 = vmul.f32 %v245, %v266
    %v269 = vmul.f32 %v246, %v266
    %v270 = vmul.f32 %v247, %v266
    %v271 = vmul.f32 %v248, %v266
    %v272 = vmul.f32 %v249, %v266
    %v273 = vmul.f32 %v250, %v266
    %v274 = vmul.f32 %v251, %v266
    %v275 = vmul.f32 %v252, %v266
    %v276 = vmul.f32 %v253, %v266
    %v277 = vmul.f32 %v254, %v266
    %v278 = vmul.f32 %v255, %v266
    %v279 = vmul.f32 %v256, %v266
    %v280 = vmul.f32 %v257, %v266
    %v281 = vmul.f32 %v258, %v266
    %v282 = vmul.f32 %v259, %v266
    %v283 = vmul.f32 %v260, %v266
    %vm284 = vcmask 130048
    %v285 = vsel %vm284, %v268, 0.0
    %286 = vadd.xlane.f32.xlu0 %v285
    %v287 = vpop.xlane.xlu0 %286
    %v288 = vsel %vm284, %v269, 0.0
    %289 = vadd.xlane.f32.xlu0 %v288
    %v290 = vpop.xlane.xlu0 %289
    %v291 = vsel %vm284, %v270, 0.0
    %292 = vadd.xlane.f32.xlu0 %v291
    %v293 = vpop.xlane.xlu0 %292
    %v294 = vsel %vm284, %v271, 0.0
    %295 = vadd.xlane.f32.xlu0 %v294
    %v296 = vpop.xlane.xlu0 %295
    %v297 = vsel %vm284, %v272, 0.0
    %298 = vadd.xlane.f32.xlu0 %v297
    %v299 = vpop.xlane.xlu0 %298
    %v300 = vsel %vm284, %v273, 0.0
    %301 = vadd.xlane.f32.xlu0 %v300
    %v302 = vpop.xlane.xlu0 %301
    %v303 = vsel %vm284, %v274, 0.0
    %304 = vadd.xlane.f32.xlu0 %v303
    %v305 = vpop.xlane.xlu0 %304
    %v306 = vsel %vm284, %v275, 0.0
    %307 = vadd.xlane.f32.xlu0 %v306
    %v308 = vpop.xlane.xlu0 %307
    %v309 = vsel %vm284, %v276, 0.0
    %310 = vadd.xlane.f32.xlu0 %v309
    %v311 = vpop.xlane.xlu0 %310
    %v312 = vsel %vm284, %v277, 0.0
    %313 = vadd.xlane.f32.xlu0 %v312
    %v314 = vpop.xlane.xlu0 %313
    %v315 = vsel %vm284, %v278, 0.0
    %316 = vadd.xlane.f32.xlu0 %v315
    %v317 = vpop.xlane.xlu0 %316
    %v318 = vsel %vm284, %v279, 0.0
    %319 = vadd.xlane.f32.xlu0 %v318
    %v320 = vpop.xlane.xlu0 %319
    %v321 = vsel %vm284, %v280, 0.0
    %322 = vadd.xlane.f32.xlu0 %v321
    %v323 = vpop.xlane.xlu0 %322
    %v324 = vsel %vm284, %v281, 0.0
    %325 = vadd.xlane.f32.xlu0 %v324
    %v326 = vpop.xlane.xlu0 %325
    %v327 = vsel %vm284, %v282, 0.0
    %328 = vadd.xlane.f32.xlu0 %v327
    %v329 = vpop.xlane.xlu0 %328
    %v330 = vsel %vm284, %v283, 0.0
    %331 = vadd.xlane.f32.xlu0 %v330
    %v332 = vpop.xlane.xlu0 %331
    %v333 = vld [vmem:[#allocation2] sm:$0x1]
    %v335 = vlaneseq
    %v336 = vshrl.u32 %v335, 7
    %v337 = vsub.s32 0, %v336
    %v338 = vrot.slane %v333, %v337
    %339 = vset.pattern.permute.xlu0 0
    %340 = vperm.xlu0 %339, %v338
    %v341 = vpop.permute.xlu0 %340
    %v343 = vadd.f32 %v287, %v341
    %v344 = vadd.f32 %v290, %v341
    %v345 = vadd.f32 %v293, %v341
    %v346 = vadd.f32 %v296, %v341
    %v347 = vadd.f32 %v299, %v341
    %v348 = vadd.f32 %v302, %v341
    %v349 = vadd.f32 %v305, %v341
    %v350 = vadd.f32 %v308, %v341
    %v351 = vadd.f32 %v311, %v341
    %v352 = vadd.f32 %v314, %v341
    %v353 = vadd.f32 %v317, %v341
    %v354 = vadd.f32 %v320, %v341
    %v355 = vadd.f32 %v323, %v341
    %v356 = vadd.f32 %v326, %v341
    %v357 = vadd.f32 %v329, %v341
    %v358 = vadd.f32 %v332, %v341
    %v359 = vld [vmem:[%s1] sm:$0xff]
    %v360 = vlaneseq
    %v361 = vand.u32 %v360, 127
    %362 = vset.pattern.permute.xlu0 0
    %363 = vperm.xlu0 %362, %v359
    %v364 = vpop.permute.xlu0 %363
    %vm365 = vcmp.lt.s32.totalorder %v361, %v364
    %v382 = vlaneseq
    %v383 = vshrl.u32 %v382, 7
    %v384 = vsub.s32 %v361, %v383
    %v385 = vrot.slane %v343, %v384
    %v386 = vadd.s32 %v361, 4294967288
    %v387 = vlaneseq
    %v388 = vshrl.u32 %v387, 7
    %v389 = vsub.s32 %v386, %v388
    %v390 = vrot.slane %v344, %v389
    %vm391 = vcmask 130112
    %v392 = vsel %vm391, %v390, %v385
    %v393 = vlaneseq
    %v394 = vshrl.u32 %v393, 7
    %v395 = vsub.s32 %v361, %v394
    %v396 = vrot.slane %v345, %v395
    %v397 = vlaneseq
    %v398 = vshrl.u32 %v397, 7
    %v399 = vsub.s32 %v386, %v398
    %v400 = vrot.slane %v346, %v399
    %v401 = vsel %vm391, %v400, %v396
    %v402 = vlaneseq
    %v403 = vshrl.u32 %v402, 7
    %v404 = vsub.s32 %v361, %v403
    %v405 = vrot.slane %v347, %v404
    %v406 = vlaneseq
    %v407 = vshrl.u32 %v406, 7
    %v408 = vsub.s32 %v386, %v407
    %v409 = vrot.slane %v348, %v408
    %v410 = vsel %vm391, %v409, %v405
    %v411 = vlaneseq
    %v412 = vshrl.u32 %v411, 7
    %v413 = vsub.s32 %v361, %v412
    %v414 = vrot.slane %v349, %v413
    %v415 = vlaneseq
    %v416 = vshrl.u32 %v415, 7
    %v417 = vsub.s32 %v386, %v416
    %v418 = vrot.slane %v350, %v417
    %v419 = vsel %vm391, %v418, %v414
    %v420 = vlaneseq
    %v421 = vshrl.u32 %v420, 7
    %v422 = vsub.s32 %v361, %v421
    %v423 = vrot.slane %v351, %v422
    %v424 = vlaneseq
    %v425 = vshrl.u32 %v424, 7
    %v426 = vsub.s32 %v386, %v425
    %v427 = vrot.slane %v352, %v426
    %v428 = vsel %vm391, %v427, %v423
    %v429 = vlaneseq
    %v430 = vshrl.u32 %v429, 7
    %v431 = vsub.s32 %v361, %v430
    %v432 = vrot.slane %v353, %v431
    %v433 = vlaneseq
    %v434 = vshrl.u32 %v433, 7
    %v435 = vsub.s32 %v386, %v434
    %v436 = vrot.slane %v354, %v435
    %v437 = vsel %vm391, %v436, %v432
    %v438 = vlaneseq
    %v439 = vshrl.u32 %v438, 7
    %v440 = vsub.s32 %v361, %v439
    %v441 = vrot.slane %v355, %v440
    %v442 = vlaneseq
    %v443 = vshrl.u32 %v442, 7
    %v444 = vsub.s32 %v386, %v443
    %v445 = vrot.slane %v356, %v444
    %v446 = vsel %vm391, %v445, %v441
    %v447 = vlaneseq
    %v448 = vshrl.u32 %v447, 7
    %v449 = vsub.s32 %v361, %v448
    %v450 = vrot.slane %v357, %v449
    %v451 = vlaneseq
    %v452 = vshrl.u32 %v451, 7
    %v453 = vsub.s32 %v386, %v452
    %v454 = vrot.slane %v358, %v453
    %v455 = vsel %vm391, %v454, %v450
    %vm456 = vcmask 1041409
    %v457 = vsel %vm456, %v401, %v392
    %vm458 = vcmask 1042434
    %v459 = vsel %vm458, %v410, %v457
    %vm460 = vcmask 1043459
    %v461 = vsel %vm460, %v419, %v459
    %vm462 = vcmask 1044484
    %v463 = vsel %vm462, %v428, %v461
    %vm464 = vcmask 1045509
    %v465 = vsel %vm464, %v437, %v463
    %vm466 = vcmask 1046534
    %v467 = vsel %vm466, %v446, %v465
    %vm468 = vcmask 1047559
    %v469 = vsel %vm468, %v455, %v467
    %v471 = vsel %vm365, %v469, -1e+30
    %v472 = vsel %vm284, %v471, -inf
    %473 = vmax.xlane.f32.xlu0 %v472
    %v474 = vpop.xlane.xlu0 %473
    %v475 = vsub.f32 %v471, %v474
    %v476 = vmul.f32 %v475, 1.442695
    %v477 = vpow.pop %v476
    %v478 = vsel %vm365, 1, 0
    %v479 = vcvt.s32.f32 %v478
    %v480 = vmul.f32 %v477, %v479
    %v481 = vsel %vm284, %v480, 0.0
    %482 = vadd.xlane.f32.xlu0 %v481
    %v483 = vpop.xlane.xlu0 %482
    %v484 = vmax.f32 %v483, 1e-30
    %v485 = vrcp.pop %v484
    %v486 = vmul.f32 %v480, %v485
    %487 = vst.msk [vmem:[#allocation7] sm:$0xff] %vm284, %v486
    %v488 = vpack.c.bf16 %v486, %v486
    %v491 = vunpack.c.l.s4 1966171168
    %v492 = vunpack.c.0.s8 %v491
    %v493 = vlaneseq
    %v494 = vshrl.u32 %v493, 7
    %v495 = vsub.s32 %v492, %v494
    %v496 = vrot.slane %v488, %v495
    %v497 = vcombine.high %v496, %v496
    %v499 = vunpack.c.l.s4 1966171168
    %v500 = vunpack.c.0.s8 %v499
    %v501 = vlaneseq
    %v502 = vshrl.u32 %v501, 7
    %v503 = vsub.s32 %v500, %v502
    %v504 = vrot.slane %v496, %v503
    %v506 = vunpack.c.l.s4 1966171168
    %v507 = vunpack.c.0.s8 %v506
    %v508 = vlaneseq
    %v509 = vshrl.u32 %v508, 7
    %v510 = vsub.s32 %v507, %v509
    %v511 = vrot.slane %v497, %v510
    %v512 = vcombine.high %v504, %v504
    %v513 = vcombine.high %v511, %v511
    %v514 = vunpack.i.l.s16 %v504
    %v515 = vunpack.i.h.s16 %v504
    %v516 = vunpack.i.l.s16 %v511
    %v517 = vunpack.i.h.s16 %v511
    %v518 = vunpack.i.l.s16 %v512
    %v519 = vunpack.i.h.s16 %v512
    %v520 = vunpack.i.l.s16 %v513
    %v521 = vunpack.i.h.s16 %v513
    %v522 = vpack.i.b16 %v514, %v514
    %v523 = vlaneseq
    %v524 = vshrl.u32 %v523, 7
    %v525 = vsub.s32 0, %v524
    %v526 = vrot.slane %v522, %v525
    %v529 = vsel %vm284, %v526, 0
    %531 = vmatprep.subr.bf16.mxu0 0
    %532 = vmatpush1.bf16.msra.mxu0 0
    %533 = vmatprep.subr.bf16.mxu0 0
    %534 = vmatpush1.bf16.msra.mxu0 0
    %535 = vmatprep.subr.bf16.mxu0 0
    %536 = vmatpush1.bf16.msra.mxu0 0
    %537 = vmatprep.subr.bf16.mxu0 0
    %538 = vmatpush1.bf16.msra.mxu0 0
    %539 = vmatprep.subr.bf16.mxu0 0
    %540 = vmatpush1.bf16.msra.mxu0 0
    %541 = vmatprep.subr.bf16.mxu0 0
    %542 = vmatpush1.bf16.msra.mxu0 0
    %543 = vmatprep.subr.bf16.mxu0 0
    %544 = vmatpush1.bf16.msra.mxu0 0
    %545 = vmatprep.subr.bf16.mxu0 0
    %546 = vmatpush1.bf16.msra.mxu0 %v103
    %547 = vmatprep.subr.bf16.mxu0 0
    %548 = vmatpush2.bf16.msra.mxu0 0
    %549 = vmatprep.subr.bf16.mxu0 0
    %550 = vmatpush2.bf16.msra.mxu0 0
    %551 = vmatprep.subr.bf16.mxu0 0
    %552 = vmatpush2.bf16.msra.mxu0 0
    %553 = vmatprep.subr.bf16.mxu0 0
    %554 = vmatpush2.bf16.msra.mxu0 0
    %555 = vmatprep.subr.bf16.mxu0 0
    %556 = vmatpush2.bf16.msra.mxu0 0
    %557 = vmatprep.subr.bf16.mxu0 0
    %558 = vmatpush2.bf16.msra.mxu0 0
    %559 = vmatprep.subr.bf16.mxu0 0
    %560 = vmatpush2.bf16.msra.mxu0 0
    %561 = vmatprep.subr.bf16.mxu0 0
    %562 = vmatpush2.bf16.msra.mxu0 0
    %563 = vmatprep.mubr.bf16.mxu0 0
    %564 = vmatmul.mubr.bf16.gmra.mxu0 %v529
    %v565 = vpop.f32.mrf.mxu0
    %v566 = vadd.f32 0.0, %v565
    %v567 = vpop.f32.mrf.mxu0
    %v568 = vpop.f32.mrf.mxu0
    %v569 = vpop.f32.mrf.mxu0
    %570 = vdwg.mxu0
    %v571 = vpack.i.b16 %v515, %v515
    %v572 = vlaneseq
    %v573 = vshrl.u32 %v572, 7
    %v574 = vsub.s32 0, %v573
    %v575 = vrot.slane %v571, %v574
    %v578 = vsel %vm284, %v575, 0
    %580 = vmatprep.subr.bf16.mxu0 0
    %581 = vmatpush1.bf16.msra.mxu0 0
    %582 = vmatprep.subr.bf16.mxu0 0
    %583 = vmatpush1.bf16.msra.mxu0 0
    %584 = vmatprep.subr.bf16.mxu0 0
    %585 = vmatpush1.bf16.msra.mxu0 0
    %586 = vmatprep.subr.bf16.mxu0 0
    %587 = vmatpush1.bf16.msra.mxu0 0
    %588 = vmatprep.subr.bf16.mxu0 0
    %589 = vmatpush1.bf16.msra.mxu0 0
    %590 = vmatprep.subr.bf16.mxu0 0
    %591 = vmatpush1.bf16.msra.mxu0 0
    %592 = vmatprep.subr.bf16.mxu0 0
    %593 = vmatpush1.bf16.msra.mxu0 0
    %594 = vmatprep.subr.bf16.mxu0 0
    %595 = vmatpush1.bf16.msra.mxu0 %v104
    %596 = vmatprep.subr.bf16.mxu0 0
    %597 = vmatpush2.bf16.msra.mxu0 0
    %598 = vmatprep.subr.bf16.mxu0 0
    %599 = vmatpush2.bf16.msra.mxu0 0
    %600 = vmatprep.subr.bf16.mxu0 0
    %601 = vmatpush2.bf16.msra.mxu0 0
    %602 = vmatprep.subr.bf16.mxu0 0
    %603 = vmatpush2.bf16.msra.mxu0 0
    %604 = vmatprep.subr.bf16.mxu0 0
    %605 = vmatpush2.bf16.msra.mxu0 0
    %606 = vmatprep.subr.bf16.mxu0 0
    %607 = vmatpush2.bf16.msra.mxu0 0
    %608 = vmatprep.subr.bf16.mxu0 0
    %609 = vmatpush2.bf16.msra.mxu0 0
    %610 = vmatprep.subr.bf16.mxu0 0
    %611 = vmatpush2.bf16.msra.mxu0 0
    %612 = vmatprep.mubr.bf16.mxu0 0
    %613 = vmatmul.mubr.bf16.gmra.mxu0 %v578
    %v614 = vpop.f32.mrf.mxu0
    %v615 = vadd.f32 0.0, %v614
    %v616 = vpop.f32.mrf.mxu0
    %v617 = vpop.f32.mrf.mxu0
    %v618 = vpop.f32.mrf.mxu0
    %619 = vdwg.mxu0
    %v620 = vpack.i.b16 %v516, %v516
    %v621 = vlaneseq
    %v622 = vshrl.u32 %v621, 7
    %v623 = vsub.s32 0, %v622
    %v624 = vrot.slane %v620, %v623
    %v627 = vsel %vm284, %v624, 0
    %629 = vmatprep.subr.bf16.mxu0 0
    %630 = vmatpush1.bf16.msra.mxu0 0
    %631 = vmatprep.subr.bf16.mxu0 0
    %632 = vmatpush1.bf16.msra.mxu0 0
    %633 = vmatprep.subr.bf16.mxu0 0
    %634 = vmatpush1.bf16.msra.mxu0 0
    %635 = vmatprep.subr.bf16.mxu0 0
    %636 = vmatpush1.bf16.msra.mxu0 0
    %637 = vmatprep.subr.bf16.mxu0 0
    %638 = vmatpush1.bf16.msra.mxu0 0
    %639 = vmatprep.subr.bf16.mxu0 0
    %640 = vmatpush1.bf16.msra.mxu0 0
    %641 = vmatprep.subr.bf16.mxu0 0
    %642 = vmatpush1.bf16.msra.mxu0 0
    %643 = vmatprep.subr.bf16.mxu0 0
    %644 = vmatpush1.bf16.msra.mxu0 %v105
    %645 = vmatprep.subr.bf16.mxu0 0
    %646 = vmatpush2.bf16.msra.mxu0 0
    %647 = vmatprep.subr.bf16.mxu0 0
    %648 = vmatpush2.bf16.msra.mxu0 0
    %649 = vmatprep.subr.bf16.mxu0 0
    %650 = vmatpush2.bf16.msra.mxu0 0
    %651 = vmatprep.subr.bf16.mxu0 0
    %652 = vmatpush2.bf16.msra.mxu0 0
    %653 = vmatprep.subr.bf16.mxu0 0
    %654 = vmatpush2.bf16.msra.mxu0 0
    %655 = vmatprep.subr.bf16.mxu0 0
    %656 = vmatpush2.bf16.msra.mxu0 0
    %657 = vmatprep.subr.bf16.mxu0 0
    %658 = vmatpush2.bf16.msra.mxu0 0
    %659 = vmatprep.subr.bf16.mxu0 0
    %660 = vmatpush2.bf16.msra.mxu0 0
    %661 = vmatprep.mubr.bf16.mxu0 0
    %662 = vmatmul.mubr.bf16.gmra.mxu0 %v627
    %v663 = vpop.f32.mrf.mxu0
    %v664 = vadd.f32 0.0, %v663
    %v665 = vpop.f32.mrf.mxu0
    %v666 = vpop.f32.mrf.mxu0
    %v667 = vpop.f32.mrf.mxu0
    %668 = vdwg.mxu0
    %v669 = vpack.i.b16 %v517, %v517
    %v670 = vlaneseq
    %v671 = vshrl.u32 %v670, 7
    %v672 = vsub.s32 0, %v671
    %v673 = vrot.slane %v669, %v672
    %v676 = vsel %vm284, %v673, 0
    %678 = vmatprep.subr.bf16.mxu0 0
    %679 = vmatpush1.bf16.msra.mxu0 0
    %680 = vmatprep.subr.bf16.mxu0 0
    %681 = vmatpush1.bf16.msra.mxu0 0
    %682 = vmatprep.subr.bf16.mxu0 0
    %683 = vmatpush1.bf16.msra.mxu0 0
    %684 = vmatprep.subr.bf16.mxu0 0
    %685 = vmatpush1.bf16.msra.mxu0 0
    %686 = vmatprep.subr.bf16.mxu0 0
    %687 = vmatpush1.bf16.msra.mxu0 0
    %688 = vmatprep.subr.bf16.mxu0 0
    %689 = vmatpush1.bf16.msra.mxu0 0
    %690 = vmatprep.subr.bf16.mxu0 0
    %691 = vmatpush1.bf16.msra.mxu0 0
    %692 = vmatprep.subr.bf16.mxu0 0
    %693 = vmatpush1.bf16.msra.mxu0 %v106
    %694 = vmatprep.subr.bf16.mxu0 0
    %695 = vmatpush2.bf16.msra.mxu0 0
    %696 = vmatprep.subr.bf16.mxu0 0
    %697 = vmatpush2.bf16.msra.mxu0 0
    %698 = vmatprep.subr.bf16.mxu0 0
    %699 = vmatpush2.bf16.msra.mxu0 0
    %700 = vmatprep.subr.bf16.mxu0 0
    %701 = vmatpush2.bf16.msra.mxu0 0
    %702 = vmatprep.subr.bf16.mxu0 0
    %703 = vmatpush2.bf16.msra.mxu0 0
    %704 = vmatprep.subr.bf16.mxu0 0
    %705 = vmatpush2.bf16.msra.mxu0 0
    %706 = vmatprep.subr.bf16.mxu0 0
    %707 = vmatpush2.bf16.msra.mxu0 0
    %708 = vmatprep.subr.bf16.mxu0 0
    %709 = vmatpush2.bf16.msra.mxu0 0
    %710 = vmatprep.mubr.bf16.mxu0 0
    %711 = vmatmul.mubr.bf16.gmra.mxu0 %v676
    %v712 = vpop.f32.mrf.mxu0
    %v713 = vadd.f32 0.0, %v712
    %v714 = vpop.f32.mrf.mxu0
    %v715 = vpop.f32.mrf.mxu0
    %v716 = vpop.f32.mrf.mxu0
    %717 = vdwg.mxu0
    %v718 = vpack.i.b16 %v518, %v518
    %v719 = vlaneseq
    %v720 = vshrl.u32 %v719, 7
    %v721 = vsub.s32 0, %v720
    %v722 = vrot.slane %v718, %v721
    %v725 = vsel %vm284, %v722, 0
    %727 = vmatprep.subr.bf16.mxu0 0
    %728 = vmatpush1.bf16.msra.mxu0 0
    %729 = vmatprep.subr.bf16.mxu0 0
    %730 = vmatpush1.bf16.msra.mxu0 0
    %731 = vmatprep.subr.bf16.mxu0 0
    %732 = vmatpush1.bf16.msra.mxu0 0
    %733 = vmatprep.subr.bf16.mxu0 0
    %734 = vmatpush1.bf16.msra.mxu0 0
    %735 = vmatprep.subr.bf16.mxu0 0
    %736 = vmatpush1.bf16.msra.mxu0 0
    %737 = vmatprep.subr.bf16.mxu0 0
    %738 = vmatpush1.bf16.msra.mxu0 0
    %739 = vmatprep.subr.bf16.mxu0 0
    %740 = vmatpush1.bf16.msra.mxu0 0
    %741 = vmatprep.subr.bf16.mxu0 0
    %742 = vmatpush1.bf16.msra.mxu0 %v107
    %743 = vmatprep.subr.bf16.mxu0 0
    %744 = vmatpush2.bf16.msra.mxu0 0
    %745 = vmatprep.subr.bf16.mxu0 0
    %746 = vmatpush2.bf16.msra.mxu0 0
    %747 = vmatprep.subr.bf16.mxu0 0
    %748 = vmatpush2.bf16.msra.mxu0 0
    %749 = vmatprep.subr.bf16.mxu0 0
    %750 = vmatpush2.bf16.msra.mxu0 0
    %751 = vmatprep.subr.bf16.mxu0 0
    %752 = vmatpush2.bf16.msra.mxu0 0
    %753 = vmatprep.subr.bf16.mxu0 0
    %754 = vmatpush2.bf16.msra.mxu0 0
    %755 = vmatprep.subr.bf16.mxu0 0
    %756 = vmatpush2.bf16.msra.mxu0 0
    %757 = vmatprep.subr.bf16.mxu0 0
    %758 = vmatpush2.bf16.msra.mxu0 0
    %759 = vmatprep.mubr.bf16.mxu0 0
    %760 = vmatmul.mubr.bf16.gmra.mxu0 %v725
    %v761 = vpop.f32.mrf.mxu0
    %v762 = vadd.f32 0.0, %v761
    %v763 = vpop.f32.mrf.mxu0
    %v764 = vpop.f32.mrf.mxu0
    %v765 = vpop.f32.mrf.mxu0
    %766 = vdwg.mxu0
    %v767 = vpack.i.b16 %v519, %v519
    %v768 = vlaneseq
    %v769 = vshrl.u32 %v768, 7
    %v770 = vsub.s32 0, %v769
    %v771 = vrot.slane %v767, %v770
    %v774 = vsel %vm284, %v771, 0
    %776 = vmatprep.subr.bf16.mxu0 0
    %777 = vmatpush1.bf16.msra.mxu0 0
    %778 = vmatprep.subr.bf16.mxu0 0
    %779 = vmatpush1.bf16.msra.mxu0 0
    %780 = vmatprep.subr.bf16.mxu0 0
    %781 = vmatpush1.bf16.msra.mxu0 0
    %782 = vmatprep.subr.bf16.mxu0 0
    %783 = vmatpush1.bf16.msra.mxu0 0
    %784 = vmatprep.subr.bf16.mxu0 0
    %785 = vmatpush1.bf16.msra.mxu0 0
    %786 = vmatprep.subr.bf16.mxu0 0
    %787 = vmatpush1.bf16.msra.mxu0 0
    %788 = vmatprep.subr.bf16.mxu0 0
    %789 = vmatpush1.bf16.msra.mxu0 0
    %790 = vmatprep.subr.bf16.mxu0 0
    %791 = vmatpush1.bf16.msra.mxu0 %v108
    %792 = vmatprep.subr.bf16.mxu0 0
    %793 = vmatpush2.bf16.msra.mxu0 0
    %794 = vmatprep.subr.bf16.mxu0 0
    %795 = vmatpush2.bf16.msra.mxu0 0
    %796 = vmatprep.subr.bf16.mxu0 0
    %797 = vmatpush2.bf16.msra.mxu0 0
    %798 = vmatprep.subr.bf16.mxu0 0
    %799 = vmatpush2.bf16.msra.mxu0 0
    %800 = vmatprep.subr.bf16.mxu0 0
    %801 = vmatpush2.bf16.msra.mxu0 0
    %802 = vmatprep.subr.bf16.mxu0 0
    %803 = vmatpush2.bf16.msra.mxu0 0
    %804 = vmatprep.subr.bf16.mxu0 0
    %805 = vmatpush2.bf16.msra.mxu0 0
    %806 = vmatprep.subr.bf16.mxu0 0
    %807 = vmatpush2.bf16.msra.mxu0 0
    %808 = vmatprep.mubr.bf16.mxu0 0
    %809 = vmatmul.mubr.bf16.gmra.mxu0 %v774
    %v810 = vpop.f32.mrf.mxu0
    %v811 = vadd.f32 0.0, %v810
    %v812 = vpop.f32.mrf.mxu0
    %v813 = vpop.f32.mrf.mxu0
    %v814 = vpop.f32.mrf.mxu0
    %815 = vdwg.mxu0
    %v816 = vpack.i.b16 %v520, %v520
    %v817 = vlaneseq
    %v818 = vshrl.u32 %v817, 7
    %v819 = vsub.s32 0, %v818
    %v820 = vrot.slane %v816, %v819
    %v823 = vsel %vm284, %v820, 0
    %825 = vmatprep.subr.bf16.mxu0 0
    %826 = vmatpush1.bf16.msra.mxu0 0
    %827 = vmatprep.subr.bf16.mxu0 0
    %828 = vmatpush1.bf16.msra.mxu0 0
    %829 = vmatprep.subr.bf16.mxu0 0
    %830 = vmatpush1.bf16.msra.mxu0 0
    %831 = vmatprep.subr.bf16.mxu0 0
    %832 = vmatpush1.bf16.msra.mxu0 0
    %833 = vmatprep.subr.bf16.mxu0 0
    %834 = vmatpush1.bf16.msra.mxu0 0
    %835 = vmatprep.subr.bf16.mxu0 0
    %836 = vmatpush1.bf16.msra.mxu0 0
    %837 = vmatprep.subr.bf16.mxu0 0
    %838 = vmatpush1.bf16.msra.mxu0 0
    %839 = vmatprep.subr.bf16.mxu0 0
    %840 = vmatpush1.bf16.msra.mxu0 %v109
    %841 = vmatprep.subr.bf16.mxu0 0
    %842 = vmatpush2.bf16.msra.mxu0 0
    %843 = vmatprep.subr.bf16.mxu0 0
    %844 = vmatpush2.bf16.msra.mxu0 0
    %845 = vmatprep.subr.bf16.mxu0 0
    %846 = vmatpush2.bf16.msra.mxu0 0
    %847 = vmatprep.subr.bf16.mxu0 0
    %848 = vmatpush2.bf16.msra.mxu0 0
    %849 = vmatprep.subr.bf16.mxu0 0
    %850 = vmatpush2.bf16.msra.mxu0 0
    %851 = vmatprep.subr.bf16.mxu0 0
    %852 = vmatpush2.bf16.msra.mxu0 0
    %853 = vmatprep.subr.bf16.mxu0 0
    %854 = vmatpush2.bf16.msra.mxu0 0
    %855 = vmatprep.subr.bf16.mxu0 0
    %856 = vmatpush2.bf16.msra.mxu0 0
    %857 = vmatprep.mubr.bf16.mxu0 0
    %858 = vmatmul.mubr.bf16.gmra.mxu0 %v823
    %v859 = vpop.f32.mrf.mxu0
    %v860 = vadd.f32 0.0, %v859
    %v861 = vpop.f32.mrf.mxu0
    %v862 = vpop.f32.mrf.mxu0
    %v863 = vpop.f32.mrf.mxu0
    %864 = vdwg.mxu0
    %v865 = vpack.i.b16 %v521, %v521
    %v866 = vlaneseq
    %v867 = vshrl.u32 %v866, 7
    %v868 = vsub.s32 0, %v867
    %v869 = vrot.slane %v865, %v868
    %v872 = vsel %vm284, %v869, 0
    %874 = vmatprep.subr.bf16.mxu0 0
    %875 = vmatpush1.bf16.msra.mxu0 0
    %876 = vmatprep.subr.bf16.mxu0 0
    %877 = vmatpush1.bf16.msra.mxu0 0
    %878 = vmatprep.subr.bf16.mxu0 0
    %879 = vmatpush1.bf16.msra.mxu0 0
    %880 = vmatprep.subr.bf16.mxu0 0
    %881 = vmatpush1.bf16.msra.mxu0 0
    %882 = vmatprep.subr.bf16.mxu0 0
    %883 = vmatpush1.bf16.msra.mxu0 0
    %884 = vmatprep.subr.bf16.mxu0 0
    %885 = vmatpush1.bf16.msra.mxu0 0
    %886 = vmatprep.subr.bf16.mxu0 0
    %887 = vmatpush1.bf16.msra.mxu0 0
    %888 = vmatprep.subr.bf16.mxu0 0
    %889 = vmatpush1.bf16.msra.mxu0 %v110
    %890 = vmatprep.subr.bf16.mxu0 0
    %891 = vmatpush2.bf16.msra.mxu0 0
    %892 = vmatprep.subr.bf16.mxu0 0
    %893 = vmatpush2.bf16.msra.mxu0 0
    %894 = vmatprep.subr.bf16.mxu0 0
    %895 = vmatpush2.bf16.msra.mxu0 0
    %896 = vmatprep.subr.bf16.mxu0 0
    %897 = vmatpush2.bf16.msra.mxu0 0
    %898 = vmatprep.subr.bf16.mxu0 0
    %899 = vmatpush2.bf16.msra.mxu0 0
    %900 = vmatprep.subr.bf16.mxu0 0
    %901 = vmatpush2.bf16.msra.mxu0 0
    %902 = vmatprep.subr.bf16.mxu0 0
    %903 = vmatpush2.bf16.msra.mxu0 0
    %904 = vmatprep.subr.bf16.mxu0 0
    %905 = vmatpush2.bf16.msra.mxu0 0
    %906 = vmatprep.mubr.bf16.mxu0 0
    %907 = vmatmul.mubr.bf16.gmra.mxu0 %v872
    %v908 = vpop.f32.mrf.mxu0
    %v909 = vadd.f32 0.0, %v908
    %v910 = vpop.f32.mrf.mxu0
    %v911 = vpop.f32.mrf.mxu0
    %v912 = vpop.f32.mrf.mxu0
    %913 = vdwg.mxu0
    %v922 = vrot.slane %v615, 7
    %v923 = vsel %vm456, %v922, %v566
    %v924 = vrot.slane %v664, 6
    %v925 = vsel %vm458, %v924, %v923
    %v926 = vrot.slane %v713, 5
    %v927 = vsel %vm460, %v926, %v925
    %v928 = vrot.slane %v762, 4
    %v929 = vsel %vm462, %v928, %v927
    %v930 = vrot.slane %v811, 3
    %v931 = vsel %vm464, %v930, %v929
    %v932 = vrot.slane %v860, 2
    %v933 = vsel %vm466, %v932, %v931
    %v934 = vrot.slane %v909, 1
    %v935 = vsel %vm468, %v934, %v933
    %937 = vst.msk [vmem:[#allocation6] sm:$0xff] %vm123, %v935
    // Predicated region
    $region30: #{tpu_custom_call.1} parent=1 // pred_check
      _
    $region31: #{tpu_custom_call.1} parent=1 // pred_check_branch
      %939 = sbr.rel (0) target = $region33
    $region32: #{tpu_custom_call.1} parent=1 // pred_region
      %s941 = ssub.s32 128, 128
      %942 = vsyncadd [#allocation5], %s941
      %s944 = sshll.u32 [#allocation6], 4
      %s945 = int_to_ptr.vmem [resolvable:$true] %s944
      %947 = dma.vmem_to_hbm [thread:$0]  %s945, 128, %s6, [#allocation5]
    $region33: #{tpu_custom_call.1} parent=1 // pred_fallthru
      _
    // Predicated region
    $region34: #{tpu_custom_call.1} parent=1 // pred_check
      _
    $region35: #{tpu_custom_call.1} parent=1 // pred_check_branch
      %949 = sbr.rel (0) target = $region37
    $region36: #{tpu_custom_call.1} parent=1 // pred_region
      %s951 = ssub.s32 128, 128
      %952 = vsyncadd [#allocation8], %s951
      %s954 = sshll.u32 [#allocation7], 4
      %s955 = int_to_ptr.vmem [resolvable:$true] %s954
      %957 = dma.vmem_to_hbm [thread:$0]  %s955, 128, %s7, [#allocation8]
    $region37: #{tpu_custom_call.1} parent=1 // pred_fallthru
      _
    // Predicated region
    $region38: #{tpu_custom_call.1} parent=1 // pred_check
      _
    $region39: #{tpu_custom_call.1} parent=1 // pred_check_branch
      %959 = sbr.rel (0) target = $region41
    $region40: #{tpu_custom_call.1} parent=1 // pred_region
      %960 = dma.done [#allocation5], 128
    $region41: #{tpu_custom_call.1} parent=1 // pred_fallthru
      _
    // Predicated region
    $region42: #{tpu_custom_call.1} parent=1 // pred_check
      _
    $region43: #{tpu_custom_call.1} parent=1 // pred_check_branch
      %962 = sbr.rel (0) target = $region45
    $region44: #{tpu_custom_call.1} parent=1 // pred_region
      %963 = dma.done [#allocation8], 128
    $region45: #{tpu_custom_call.1} parent=1 // pred_fallthru
      _
    %964 = vsyncpa [#allocation4], 1
    %965 = vsyncpa [#allocation5], 1
    %966 = vsyncpa [#allocation8], 1

</llo_original>
